<compile_context>
chip_gen: v7x
topology: tpu7x:2x2x1
jax: 0.10.0
libtpu: 0.0.40
codegen_flags: <defaults>
</compile_context>

<pallas_src>
import functools

import jax
import jax.numpy as jnp
from jax.experimental import pallas as pl
from jax.experimental.pallas import tpu as pltpu


# ----------------------------------------------------------------------------
# small helpers
# ----------------------------------------------------------------------------
def _round_up(n, m):
    return ((n + m - 1) // m) * m


def _pad_axis(arr, axis, target):
    pad = target - arr.shape[axis]
    if pad == 0:
        return arr
    widths = [(0, 0)] * arr.ndim
    widths[axis] = (0, pad)
    return jnp.pad(arr, widths)


@functools.lru_cache(maxsize=1)
def _detect_num_cores():
    """TensorCores per chip: 2 on v7x (and v4/v5p megacore), 1 on v5e/v6e."""
    try:
        kind = jax.devices()[0].device_kind.lower()
    except Exception:  # pragma: no cover - conservative fallback
        return 1
    return 2 if ("v7" in kind or "v4" in kind or "v5p" in kind) else 1


def _pick_bk(K, bk_tile=6272):
    """K tile: prefer an exact divisor of the (128-aligned) K so no zero
    weight bytes are ever DMA'd and no K-pad copy of w1 is needed.
    Default 6272 = 49*128 divides 25088 exactly (4 K-steps, ~6.4 MB bf16)."""
    Kp = _round_up(K, 128)
    best = min(_round_up(bk_tile, 128), Kp)
    bk = best
    while bk >= 128:
        if Kp % bk == 0:
            return bk
        if bk <= best // 2:
            break
        bk -= 128
    return best  # fall back to padding K (never hit for the target shapes)


def _pick_bn(N, num_cores, max_bn=1024):
    """N tile: full N (one block) on single-TC chips; N split into >=2
    lane-dense blocks on 2-TC chips so the 'parallel' N grid axis gives each
    TensorCore its own half of the streamed weight."""
    Np = _round_up(N, 128)
    if num_cores >= 2 and Np > 128:
        bn = max(128, _round_up(pl.cdiv(Np, 2), 128))
    else:
        bn = Np
    return min(bn, _round_up(max_bn, 128), Np)


def _fold_bn_bias(gamma, beta, mean, var, bias, eps=1e-5):
    """Fold Linear bias + eval-mode BatchNorm1d into y = h * scale + shift,
    where h = x @ W.  Returns a (2, N) f32 array: row 0 = scale, row 1 = shift."""
    gamma = gamma.astype(jnp.float32)
    beta = beta.astype(jnp.float32)
    mean = mean.astype(jnp.float32)
    var = var.astype(jnp.float32)
    bias = bias.astype(jnp.float32)
    scale = gamma / jnp.sqrt(var + eps)
    shift = beta + (bias - mean) * scale
    return jnp.concatenate([scale, shift], axis=0)   # (2, N)


_VMEM_SPEC = pl.BlockSpec(memory_space=pltpu.MemorySpace.VMEM)


# ----------------------------------------------------------------------------
# Kernel 1: streaming linear + folded-BN + relu  (for the huge fc1 layer)
#   y = relu?((x @ W) * scale + shift), grid = (B//bm, Np//bn, Kp//bk),
#   K ("arbitrary") innermost with an f32 VMEM accumulator.
# ----------------------------------------------------------------------------
def _streaming_linear_kernel(x_ref, w_ref, a_ref, o_ref, acc_ref, *, apply_relu):
    k = pl.program_id(2)

    @pl.when(k == 0)
    def _():
        acc_ref[...] = jnp.zeros_like(acc_ref)

    acc_ref[...] += jnp.dot(x_ref[...], w_ref[...],
                            preferred_element_type=jnp.float32)

    @pl.when(k == pl.num_programs(2) - 1)
    def _():
        a = a_ref[...]                                  # (2, bn) f32
        y = acc_ref[...] * a[0:1, :] + a[1:2, :]        # folded bias + BN (eval)
        if apply_relu:
            y = jnp.maximum(y, 0.0)
        o_ref[...] = y.astype(o_ref.dtype)


def streaming_linear_bn_relu(x, w, a, *, apply_relu=True, out_dtype=None,
                             bk_tile=6272, num_cores=None):
    """x: (B, K), w: (K, N) (already in compute dtype), a: (2, N) f32
    -> (B, N) out_dtype.  Weight is streamed through VMEM in big tiles."""
    if out_dtype is None:
        out_dtype = x.dtype
    B, K = x.shape
    Kw, N = w.shape
    assert K == Kw and a.shape == (2, N)
    if num_cores is None:
        num_cores = _detect_num_cores()

    # B=8-ish serving batch: keep all rows in one M block.  The layer stays
    # HBM-bound up to B~256, so extra batch rows are essentially free; add an
    # M grid axis only once bm*bk tiles stop fitting comfortably.
    bm = B
    bn = _pick_bn(N, num_cores)
    bk = _pick_bk(K, bk_tile)
    Np = _round_up(N, bn)
    Kp = _round_up(K, bk)

    # For the real model (K=25088, N=1024) these pads are exact no-ops, so no
    # per-call weight copies happen; padded K contributes nothing to the dot
    # and padded N columns are sliced off after the call.
    xp = _pad_axis(x, 1, Kp)
    wp = _pad_axis(_pad_axis(w, 0, Kp), 1, Np)
    ap = _pad_axis(a.astype(jnp.float32), 1, Np)

    grid = (B // bm, Np // bn, Kp // bk)

    in_b = jnp.dtype(x.dtype).itemsize
    out_b = jnp.dtype(out_dtype).itemsize
    # double-buffered tiles + f32 accumulator, ~1.5x + small headroom; with
    # bf16 / bk=6272 / bn=512 this is ~24 MB (v7x) or ~43 MB (v5e/v6e,
    # bn=1024), well under 64 / 128 MiB physical VMEM and above the 16 MiB
    # v5e scoped default that would otherwise reject the big tiles.
    vmem_bytes = (2 * bm * bk * in_b + 2 * bk * bn * in_b
                  + 2 * 2 * bn * 4 + 2 * bm * bn * out_b + bm * bn * 4)
    vmem_limit = min(int(1.5 * vmem_bytes) + (4 << 20), 56 << 20)

    kernel = functools.partial(_streaming_linear_kernel, apply_relu=apply_relu)
    out = pl.pallas_call(
        kernel,
        out_shape=jax.ShapeDtypeStruct((B, Np), out_dtype),
        grid_spec=pltpu.PrefetchScalarGridSpec(
            num_scalar_prefetch=0,
            grid=grid,
            in_specs=[
                pl.BlockSpec((bm, bk), lambda i, j, k: (i, k)),   # x
                pl.BlockSpec((bk, bn), lambda i, j, k: (k, j)),   # W (streamed)
                pl.BlockSpec((2, bn), lambda i, j, k: (0, j)),    # scale/shift
            ],
            out_specs=pl.BlockSpec((bm, bn), lambda i, j, k: (i, j)),
            scratch_shapes=[pltpu.VMEM((bm, bn), jnp.float32)],
        ),
        # grid dim 0 is size 1; on 2-TC chips the N axis (dim 1, >=2 blocks)
        # is what megacore shards, each core streaming half of W.
        compiler_params=pltpu.CompilerParams(
            dimension_semantics=("parallel", "parallel", "arbitrary"),
            vmem_limit_bytes=vmem_limit),
    )(xp, wp, ap)
    return out[:, :N] if Np != N else out


# ----------------------------------------------------------------------------
# Kernel 2/3: fully fused MLP kernels (all weights resident in VMEM, no grid).
#   _mlp3: fc1+bn1+relu -> fc2+bn2+relu -> fc3      (small configs)
#   _mlp2:               fc2+bn2+relu -> fc3        (tail after streaming fc1)
# Final fc3 weight / bias are pre-padded to a lane-dense multiple of 128.
# ----------------------------------------------------------------------------
def _mlp3_kernel(x_ref, w1_ref, a1_ref, w2_ref, a2_ref, w3_ref, b3_ref, o_ref,
                 *, compute_dtype):
    a1 = a1_ref[...]
    h = jnp.dot(x_ref[...], w1_ref[...], preferred_element_type=jnp.float32)
    h = jnp.maximum(h * a1[0:1, :] + a1[1:2, :], 0.0)
    a2 = a2_ref[...]
    h = jnp.dot(h.astype(compute_dtype), w2_ref[...],
                preferred_element_type=jnp.float32)
    h = jnp.maximum(h * a2[0:1, :] + a2[1:2, :], 0.0)
    y = jnp.dot(h.astype(compute_dtype), w3_ref[...],
                preferred_element_type=jnp.float32)
    o_ref[...] = (y + b3_ref[...]).astype(o_ref.dtype)


def _mlp2_kernel(x_ref, w2_ref, a2_ref, w3_ref, b3_ref, o_ref, *, compute_dtype):
    a2 = a2_ref[...]
    h = jnp.dot(x_ref[...], w2_ref[...], preferred_element_type=jnp.float32)
    h = jnp.maximum(h * a2[0:1, :] + a2[1:2, :], 0.0)
    y = jnp.dot(h.astype(compute_dtype), w3_ref[...],
                preferred_element_type=jnp.float32)
    o_ref[...] = (y + b3_ref[...]).astype(o_ref.dtype)


def _run_fused(kernel_fn, args, B, NC, NCp, compute_dtype):
    total = sum(int(a.size) * a.dtype.itemsize for a in args) + B * NCp * 4
    # intermediates live in vregs/VMEM too; ~1.5x + headroom is ample and
    # stays far under v7x's 64 MiB physical VMEM.
    vmem_limit = min(int(1.5 * total) + (6 << 20), 56 << 20)
    out = pl.pallas_call(
        functools.partial(kernel_fn, compute_dtype=compute_dtype),
        out_shape=jax.ShapeDtypeStruct((B, NCp), jnp.float32),
        in_specs=[_VMEM_SPEC] * len(args),
        out_specs=_VMEM_SPEC,
        compiler_params=pltpu.CompilerParams(vmem_limit_bytes=vmem_limit),
    )(*args)
    return out[:, :NC] if NCp != NC else out


def fused_mlp3(x, w1, a1, w2, a2, w3p, b3p, num_classes):
    B = x.shape[0]
    args = (x, w1, a1, w2, a2, w3p, b3p)
    return _run_fused(_mlp3_kernel, args, B, num_classes, w3p.shape[1], w2.dtype)


def fused_mlp2(x, w2, a2, w3p, b3p, num_classes):
    B = x.shape[0]
    args = (x, w2, a2, w3p, b3p)
    return _run_fused(_mlp2_kernel, args, B, num_classes, w3p.shape[1], w2.dtype)


# ----------------------------------------------------------------------------
# Parameter construction, one-time prep, and full forward pass
# ----------------------------------------------------------------------------
def init_params(key, input_size, h1, h2, num_classes, dtype=jnp.float32):
    """Deterministic synthetic parameters (same shapes as the PyTorch module).
    Linear weights are stored pre-transposed: (in, out)."""
    ks = jax.random.split(key, 12)
    p = {}
    p["w1"] = jax.random.normal(ks[0], (input_size, h1), dtype) * 0.02
    p["b1"] = jax.random.normal(ks[1], (1, h1), dtype) * 0.02
    p["w2"] = jax.random.normal(ks[2], (h1, h2), dtype) * 0.02
    p["b2"] = jax.random.normal(ks[3], (1, h2), dtype) * 0.02
    p["w3"] = jax.random.normal(ks[4], (h2, num_classes), dtype) * 0.02
    p["b3"] = jax.random.normal(ks[5], (1, num_classes), dtype) * 0.02
    # BatchNorm1d params + running stats (eval mode)
    p["g1"] = jax.random.normal(ks[6], (1, h1), dtype) * 0.1 + 1.0
    p["be1"] = jax.random.normal(ks[7], (1, h1), dtype) * 0.1
    p["m1"] = jax.random.normal(ks[8], (1, h1), dtype) * 0.1
    p["v1"] = jax.nn.softplus(jax.random.normal(ks[9], (1, h1), dtype)) + 0.5
    p["g2"] = jax.random.normal(ks[10], (1, h2), dtype) * 0.1 + 1.0
    p["be2"] = jax.random.normal(ks[11], (1, h2), dtype) * 0.1
    p["m2"] = jnp.zeros((1, h2), dtype)
    p["v2"] = jnp.ones((1, h2), dtype)
    return p


def prepare_params(params, *, compute_dtype=jnp.bfloat16):
    """ONE-TIME host-side prep (do NOT call per forward):
      * fold Linear bias + eval-mode BatchNorm into a (2, N) f32 scale/shift,
      * cast weights to the MXU compute dtype (halves fc1 HBM traffic),
      * pad the narrow fc3 output dim to a lane-dense multiple of 128."""
    NC = params["w3"].shape[1]
    NCp = _round_up(NC, 128)
    prepared = {
        "w1": params["w1"].astype(compute_dtype),
        "w2": params["w2"].astype(compute_dtype),
        "w3": _pad_axis(params["w3"], 1, NCp).astype(compute_dtype),
        "a1": _fold_bn_bias(params["g1"], params["be1"], params["m1"],
                            params["v1"], params["b1"]),
        "a2": _fold_bn_bias(params["g2"], params["be2"], params["m2"],
                            params["v2"], params["b2"]),
        "b3": _pad_axis(params["b3"].astype(jnp.float32), 1, NCp),
        "num_classes": NC,
        "compute_dtype": compute_dtype,
    }
    return prepared


def art_classifier_forward(x_nchw, prepared, *, force_streaming=False,
                           fuse_all_weight_bytes=8 << 20, num_cores=None):
    """Eval-mode forward of ArtClassifier.  x_nchw: (B, C, H, W),
    `prepared` from prepare_params() (weights already cast / folded / padded)."""
    B = x_nchw.shape[0]
    cdt = prepared["compute_dtype"]
    x = x_nchw.reshape(B, -1).astype(cdt)                 # x.view(B, -1)

    w1, w2, w3p = prepared["w1"], prepared["w2"], prepared["w3"]
    a1, a2, b3p = prepared["a1"], prepared["a2"], prepared["b3"]
    NC = prepared["num_classes"]

    # TODO(synk): training-mode dropout / batch-statistics BN not implemented
    #             (dropout1/2/3 are identity in eval; BN uses running stats).

    w_bytes = (w1.size + w2.size + w3p.size) * jnp.dtype(cdt).itemsize
    if (not force_streaming) and w_bytes <= fuse_all_weight_bytes:
        # everything fits VMEM: one kernel, no intermediate HBM round-trips
        return fused_mlp3(x, w1, a1, w2, a2, w3p, b3p, NC)

    # full-size model path: stream fc1 weights with big exact-divisor tiles,
    # then fuse fc2+fc3 into one resident-weight tail kernel.  h is only
    # ~16 KB so the second launch's HBM round-trip is trivial.
    h = streaming_linear_bn_relu(x, w1, a1, apply_relu=True,
                                 out_dtype=cdt, num_cores=num_cores)
    return fused_mlp2(h, w2, a2, w3p, b3p, NC)


def _reference_forward(x_nchw, params, eps=1e-5):
    """Plain-JAX f32 reference for correctness checking."""
    B = x_nchw.shape[0]
    x = x_nchw.reshape(B, -1).astype(jnp.float32)
    h = x @ params["w1"] + params["b1"]
    h = (h - params["m1"]) / jnp.sqrt(params["v1"] + eps) * params["g1"] \
        + params["be1"]
    h = jnp.maximum(h, 0.0)
    h = h @ params["w2"] + params["b2"]
    h = (h - params["m2"]) / jnp.sqrt(params["v2"] + eps) * params["g2"] \
        + params["be2"]
    h = jnp.maximum(h, 0.0)
    return h @ params["w3"] + params["b3"]


if __name__ == "__main__":
    # Small shapes consistent with the module's forward:
    #   full model : (B, 512, 7, 7) -> 25088 -> 1024 -> 512 -> num_classes
    #   scaled-down: (B,   8, 8, 8) ->   512 ->  256 -> 128 -> 16
    B, C, H, W = 8, 8, 8, 8
    input_size = C * H * W
    h1, h2, num_classes = 256, 128, 16

    key = jax.random.PRNGKey(0)
    kx, kp = jax.random.split(key)
    x = jax.random.normal(kx, (B, C, H, W), jnp.float32)   # NCHW, like PyTorch
    params = init_params(kp, input_size, h1, h2, num_classes)

    ref = _reference_forward(x, params)

    # One-time weight prep (cast / fold / pad) -- outside the serving loop.
    prep_f32 = prepare_params(params, compute_dtype=jnp.float32)
    prep_bf16 = prepare_params(params, compute_dtype=jnp.bfloat16)

    # 1) exact-math path (f32), fully fused single kernel
    out_f32 = jax.block_until_ready(art_classifier_forward(x, prep_f32))
    assert out_f32.shape == (B, num_classes)
    assert jnp.allclose(out_f32, ref, atol=1e-3, rtol=1e-3)

    # 2) exact-math path (f32), streaming fc1 + fused fc2/fc3 tail
    out_f32_s = jax.block_until_ready(
        art_classifier_forward(x, prep_f32, force_streaming=True))
    assert jnp.allclose(out_f32_s, ref, atol=1e-3, rtol=1e-3)

    # 3) bf16 fast path, fully fused single kernel
    out_bf16 = jax.block_until_ready(art_classifier_forward(x, prep_bf16))
    assert out_bf16.shape == (B, num_classes)
    assert jnp.allclose(out_bf16, ref, atol=5e-2, rtol=5e-2)

    # 4) bf16 fast path, streaming fc1 + fused tail (full-model code path);
    #    exercise both the single-TC and 2-TC tiling choices.
    out_bf16_s = jax.block_until_ready(
        art_classifier_forward(x, prep_bf16, force_streaming=True))
    assert jnp.allclose(out_bf16_s, ref, atol=5e-2, rtol=5e-2)
    out_bf16_s2 = jax.block_until_ready(
        art_classifier_forward(x, prep_bf16, force_streaming=True, num_cores=2))
    assert jnp.allclose(out_bf16_s2, ref, atol=5e-2, rtol=5e-2)

    print("KERNEL_OK")
</pallas_src>

<mosaic_0001>
module attributes {stable_mosaic.version = 11 : i64} {
  func.func @_mlp3_kernel(%arg0: memref<8x512xf32, #tpu.memory_space<vmem>>, %arg1: memref<512x256xf32, #tpu.memory_space<vmem>>, %arg2: memref<2x256xf32, #tpu.memory_space<vmem>>, %arg3: memref<256x128xf32, #tpu.memory_space<vmem>>, %arg4: memref<2x128xf32, #tpu.memory_space<vmem>>, %arg5: memref<128x128xf32, #tpu.memory_space<vmem>>, %arg6: memref<1x128xf32, #tpu.memory_space<vmem>>, %arg7: memref<8x128xf32, #tpu.memory_space<vmem>>) attributes {dimension_semantics = [], scalar_prefetch = 0 : i64, scratch_operands = 0 : i64, tpu.core_type = #tpu.core_type<tc>} {
    %c0 = arith.constant 0 : index
    %c0_0 = arith.constant 0 : index
    %0 = vector.load %arg2[%c0, %c0_0] : memref<2x256xf32, #tpu.memory_space<vmem>>, vector<2x256xf32>
    %c0_1 = arith.constant 0 : index
    %c0_2 = arith.constant 0 : index
    %1 = vector.load %arg0[%c0_1, %c0_2] : memref<8x512xf32, #tpu.memory_space<vmem>>, vector<8x512xf32>
    %c0_3 = arith.constant 0 : index
    %c0_4 = arith.constant 0 : index
    %2 = vector.load %arg1[%c0_3, %c0_4] : memref<512x256xf32, #tpu.memory_space<vmem>>, vector<512x256xf32>
    %cst = arith.constant dense<0.000000e+00> : vector<8x256xf32>
    %3 = tpu.matmul %1, %2, %cst {dimension_numbers = #tpu.dot_dimension_numbers<[1], [0], [0], [1], [0, 0, 1, 1], [], []>} : vector<8x512xf32>, vector<512x256xf32>, vector<8x256xf32> -> vector<8x256xf32>
    %4 = vector.extract_strided_slice %0 {offsets = [0, 0], sizes = [1, 256], strides = [1, 1]} : vector<2x256xf32> to vector<1x256xf32>
    %5 = vector.broadcast %4 : vector<1x256xf32> to vector<8x256xf32>
    %6 = arith.mulf %3, %5 : vector<8x256xf32>
    %7 = vector.extract_strided_slice %0 {offsets = [1, 0], sizes = [1, 256], strides = [1, 1]} : vector<2x256xf32> to vector<1x256xf32>
    %8 = vector.broadcast %7 : vector<1x256xf32> to vector<8x256xf32>
    %9 = arith.addf %6, %8 : vector<8x256xf32>
    %cst_5 = arith.constant 0.000000e+00 : f32
    %10 = vector.broadcast %cst_5 : f32 to vector<8x256xf32>
    %11 = arith.maximumf %9, %10 : vector<8x256xf32>
    %c0_6 = arith.constant 0 : index
    %c0_7 = arith.constant 0 : index
    %12 = vector.load %arg4[%c0_6, %c0_7] : memref<2x128xf32, #tpu.memory_space<vmem>>, vector<2x128xf32>
    %c0_8 = arith.constant 0 : index
    %c0_9 = arith.constant 0 : index
    %13 = vector.load %arg3[%c0_8, %c0_9] : memref<256x128xf32, #tpu.memory_space<vmem>>, vector<256x128xf32>
    %cst_10 = arith.constant dense<0.000000e+00> : vector<8x128xf32>
    %14 = tpu.matmul %11, %13, %cst_10 {dimension_numbers = #tpu.dot_dimension_numbers<[1], [0], [0], [1], [0, 0, 1, 1], [], []>} : vector<8x256xf32>, vector<256x128xf32>, vector<8x128xf32> -> vector<8x128xf32>
    %15 = vector.extract_strided_slice %12 {offsets = [0, 0], sizes = [1, 128], strides = [1, 1]} : vector<2x128xf32> to vector<1x128xf32>
    %16 = vector.broadcast %15 : vector<1x128xf32> to vector<8x128xf32>
    %17 = arith.mulf %14, %16 : vector<8x128xf32>
    %18 = vector.extract_strided_slice %12 {offsets = [1, 0], sizes = [1, 128], strides = [1, 1]} : vector<2x128xf32> to vector<1x128xf32>
    %19 = vector.broadcast %18 : vector<1x128xf32> to vector<8x128xf32>
    %20 = arith.addf %17, %19 : vector<8x128xf32>
    %cst_11 = arith.constant 0.000000e+00 : f32
    %21 = vector.broadcast %cst_11 : f32 to vector<8x128xf32>
    %22 = arith.maximumf %20, %21 : vector<8x128xf32>
    %c0_12 = arith.constant 0 : index
    %c0_13 = arith.constant 0 : index
    %23 = vector.load %arg5[%c0_12, %c0_13] : memref<128x128xf32, #tpu.memory_space<vmem>>, vector<128x128xf32>
    %cst_14 = arith.constant dense<0.000000e+00> : vector<8x128xf32>
    %24 = tpu.matmul %22, %23, %cst_14 {dimension_numbers = #tpu.dot_dimension_numbers<[1], [0], [0], [1], [0, 0, 1, 1], [], []>} : vector<8x128xf32>, vector<128x128xf32>, vector<8x128xf32> -> vector<8x128xf32>
    %c0_15 = arith.constant 0 : index
    %c0_16 = arith.constant 0 : index
    %25 = vector.load %arg6[%c0_15, %c0_16] : memref<1x128xf32, #tpu.memory_space<vmem>>, vector<1x128xf32>
    %26 = vector.broadcast %25 : vector<1x128xf32> to vector<8x128xf32>
    %27 = arith.addf %24, %26 : vector<8x128xf32>
    %c0_17 = arith.constant 0 : index
    %c0_18 = arith.constant 0 : index
    %28 = vector.load %arg7[%c0_17, %c0_18] : memref<8x128xf32, #tpu.memory_space<vmem>>, vector<8x128xf32>
    tpu.vector_store %arg7[%c0_17, %c0_18], %27 {strides = array<i32>} : memref<8x128xf32, #tpu.memory_space<vmem>>, vector<8x128xf32>,
    return
  }
}

</mosaic_0001>

<llo_original>
// kernel: tpu_custom_call.1
$region0: #{tpu_custom_call.1}
  #allocation0 [shape = 'u32[]', space=smem, size = 0x4, offset = 0x4, fixed_abs, tag = 'smem constant byte address 0x4 - core index']
  #allocation1 [shape = 'u32[144,128]{1,0:T(1,128)}', space=vmem, size = 0x12000, scoped, tag = 'internal scratch']
  %s0 = inlined_call_operand.hbm [shape: f32[8,512], index: 0, kind: input, shape index: {}]
  %s1 = inlined_call_operand.hbm [shape: f32[512,256], index: 1, kind: input, shape index: {}]
  %s2 = inlined_call_operand.vmem [shape: f32[2,256], index: 2, kind: input, shape index: {}]
  %s3 = inlined_call_operand.hbm [shape: f32[256,128], index: 3, kind: input, shape index: {}]
  %s4 = inlined_call_operand.vmem [shape: f32[2,128], index: 4, kind: input, shape index: {}]
  %s5 = inlined_call_operand.hbm [shape: f32[128,128], index: 5, kind: input, shape index: {}]
  %s6 = inlined_call_operand.vmem [shape: f32[1,128], index: 6, kind: input, shape index: {}]
  %s7 = inlined_call_operand.hbm [shape: f32[8,128], index: 7, kind: output, shape index: {}]
  %s8 = sld [smem:[#allocation0]]
  $region54: #{tpu_custom_call.1} parent=0
    _
  %s10 = ssub.s32 1, %s8
  %s11 = scalar_select 0, %s10, %s8
  $region1: #{tpu_custom_call.1} parent=0
    #allocation2 [shape = 'u8[16384]{0}', space=vmem, size = 0x4000, scoped, tag = 'input window, operand 0, single buffered']
    #allocation3 [shape = 's32[1]{0}', space=sflag, size = 0x4, scoped, tag = 'scoped memory for tpu_custom_call.1']
    #allocation4 [shape = 's32[1]{0}', space=sflag, size = 0x4, scoped, tag = 'scoped memory for tpu_custom_call.1']
    #allocation5 [shape = 'u8[524288]{0}', space=vmem, size = 0x80000, scoped, tag = 'input window, operand 1, single buffered']
    #allocation6 [shape = 's32[1]{0}', space=sflag, size = 0x4, scoped, tag = 'scoped memory for tpu_custom_call.1']
    #allocation7 [shape = 'u8[131072]{0}', space=vmem, size = 0x20000, scoped, tag = 'input window, operand 3, single buffered']
    #allocation8 [shape = 'u8[65536]{0}', space=vmem, size = 0x10000, scoped, tag = 'input window, operand 5, single buffered']
    #allocation9 [shape = 's32[1]{0}', space=sflag, size = 0x4, scoped, tag = 'scoped memory for tpu_custom_call.1']
    #allocation10 [shape = 'u8[4096]{0}', space=vmem, size = 0x1000, scoped, tag = 'output window, operand 0, single buffered']
    %12 = vsyncpa [#allocation3], 0
    %13 = vsyncpa [#allocation6], 0
    %14 = vsyncpa [#allocation9], 0
    %15 = vsyncpa [#allocation4], 0
    // Predicated region
    $region2: #{tpu_custom_call.1} parent=1 // pred_check
      _
    $region3: #{tpu_custom_call.1} parent=1 // pred_check_branch
      %17 = sbr.rel (0) target = $region5
    $region4: #{tpu_custom_call.1} parent=1 // pred_region
      %s19 = ssub.s32 512, 512
      %20 = vsyncadd [#allocation3], %s19
      %s22 = sshll.u32 [#allocation2], 4
      %s23 = int_to_ptr.vmem [resolvable:$true] %s22
      %25 = dma.hbm_to_vmem [thread:$0]  %s0, 512, %s23, [#allocation3]
    $region5: #{tpu_custom_call.1} parent=1 // pred_fallthru
      _
    // Predicated region
    $region6: #{tpu_custom_call.1} parent=1 // pred_check
      _
    $region7: #{tpu_custom_call.1} parent=1 // pred_check_branch
      %27 = sbr.rel (0) target = $region9
    $region8: #{tpu_custom_call.1} parent=1 // pred_region
      %s29 = ssub.s32 16384, 16384
      %30 = vsyncadd [#allocation6], %s29
      %s31 = sshll.u32 [#allocation5], 4
      %s32 = int_to_ptr.vmem [resolvable:$true] %s31
      %37 = dma.hbm_to_vmem [thread:$0]  %s1, 16384, %s32, [#allocation6], 256, 256, 16
    $region9: #{tpu_custom_call.1} parent=1 // pred_fallthru
      _
    // Predicated region
    $region10: #{tpu_custom_call.1} parent=1 // pred_check
      _
    $region11: #{tpu_custom_call.1} parent=1 // pred_check_branch
      %39 = sbr.rel (0) target = $region13
    $region12: #{tpu_custom_call.1} parent=1 // pred_region
      _
    $region13: #{tpu_custom_call.1} parent=1 // pred_fallthru
      _
    // Predicated region
    $region14: #{tpu_custom_call.1} parent=1 // pred_check
      _
    $region15: #{tpu_custom_call.1} parent=1 // pred_check_branch
      %41 = sbr.rel (0) target = $region17
    $region16: #{tpu_custom_call.1} parent=1 // pred_region
      %s43 = ssub.s32 4096, 4096
      %44 = vsyncadd [#allocation6], %s43
      %s45 = sshll.u32 [#allocation7], 4
      %s46 = int_to_ptr.vmem [resolvable:$true] %s45
      %51 = dma.hbm_to_vmem [thread:$0]  %s3, 4096, %s46, [#allocation6], 128, 128, 8
    $region17: #{tpu_custom_call.1} parent=1 // pred_fallthru
      _
    // Predicated region
    $region18: #{tpu_custom_call.1} parent=1 // pred_check
      _
    $region19: #{tpu_custom_call.1} parent=1 // pred_check_branch
      %53 = sbr.rel (0) target = $region21
    $region20: #{tpu_custom_call.1} parent=1 // pred_region
      _
    $region21: #{tpu_custom_call.1} parent=1 // pred_fallthru
      _
    // Predicated region
    $region22: #{tpu_custom_call.1} parent=1 // pred_check
      _
    $region23: #{tpu_custom_call.1} parent=1 // pred_check_branch
      %55 = sbr.rel (0) target = $region25
    $region24: #{tpu_custom_call.1} parent=1 // pred_region
      %s57 = ssub.s32 2048, 2048
      %58 = vsyncadd [#allocation9], %s57
      %s59 = sshll.u32 [#allocation8], 4
      %s60 = int_to_ptr.vmem [resolvable:$true] %s59
      %65 = dma.hbm_to_vmem [thread:$0]  %s5, 2048, %s60, [#allocation9], 128, 128, 8
    $region25: #{tpu_custom_call.1} parent=1 // pred_fallthru
      _
    // Predicated region
    $region26: #{tpu_custom_call.1} parent=1 // pred_check
      _
    $region27: #{tpu_custom_call.1} parent=1 // pred_check_branch
      %67 = sbr.rel (0) target = $region29
    $region28: #{tpu_custom_call.1} parent=1 // pred_region
      _
    $region29: #{tpu_custom_call.1} parent=1 // pred_fallthru
      _
    // Predicated region
    $region30: #{tpu_custom_call.1} parent=1 // pred_check
      _
    $region31: #{tpu_custom_call.1} parent=1 // pred_check_branch
      %69 = sbr.rel (0) target = $region33
    $region32: #{tpu_custom_call.1} parent=1 // pred_region
      %70 = dma.done [#allocation3], 512
    $region33: #{tpu_custom_call.1} parent=1 // pred_fallthru
      _
    // Predicated region
    $region34: #{tpu_custom_call.1} parent=1 // pred_check
      _
    $region35: #{tpu_custom_call.1} parent=1 // pred_check_branch
      %72 = sbr.rel (0) target = $region37
    $region36: #{tpu_custom_call.1} parent=1 // pred_region
      %73 = dma.done [#allocation6], 16384
    $region37: #{tpu_custom_call.1} parent=1 // pred_fallthru
      _
    // Predicated region
    $region38: #{tpu_custom_call.1} parent=1 // pred_check
      _
    $region39: #{tpu_custom_call.1} parent=1 // pred_check_branch
      %75 = sbr.rel (0) target = $region41
    $region40: #{tpu_custom_call.1} parent=1 // pred_region
      %76 = dma.done [#allocation6], 4096
    $region41: #{tpu_custom_call.1} parent=1 // pred_fallthru
      _
    // Predicated region
    $region42: #{tpu_custom_call.1} parent=1 // pred_check
      _
    $region43: #{tpu_custom_call.1} parent=1 // pred_check_branch
      %78 = sbr.rel (0) target = $region45
    $region44: #{tpu_custom_call.1} parent=1 // pred_region
      %79 = dma.done [#allocation9], 2048
    $region45: #{tpu_custom_call.1} parent=1 // pred_fallthru
      _
    %v80 = vld [vmem:[%s2] sm:$0xf]
    %v81 = vld [vmem:[#allocation2] sm:$0xff]
    %v82 = vld [vmem:[#allocation2 + $0x8] sm:$0xff]
    %v83 = vld [vmem:[#allocation2 + $0x10] sm:$0xff]
    %v84 = vld [vmem:[#allocation2 + $0x18] sm:$0xff]
    %v85 = vld [vmem:[#allocation5] sm:$0xff]
    %v86 = vld [vmem:[#allocation5 + $0x8] sm:$0xff]
    %v87 = vld [vmem:[#allocation5 + $0x10] sm:$0xff]
    %v88 = vld [vmem:[#allocation5 + $0x18] sm:$0xff]
    %v89 = vld [vmem:[#allocation5 + $0x20] sm:$0xff]
    %v90 = vld [vmem:[#allocation5 + $0x28] sm:$0xff]
    %v91 = vld [vmem:[#allocation5 + $0x30] sm:$0xff]
    %v92 = vld [vmem:[#allocation5 + $0x38] sm:$0xff]
    %v93 = vld [vmem:[#allocation5 + $0x40] sm:$0xff]
    %v94 = vld [vmem:[#allocation5 + $0x48] sm:$0xff]
    %v95 = vld [vmem:[#allocation5 + $0x50] sm:$0xff]
    %v96 = vld [vmem:[#allocation5 + $0x58] sm:$0xff]
    %v97 = vld [vmem:[#allocation5 + $0x60] sm:$0xff]
    %v98 = vld [vmem:[#allocation5 + $0x68] sm:$0xff]
    %v99 = vld [vmem:[#allocation5 + $0x70] sm:$0xff]
    %v100 = vld [vmem:[#allocation5 + $0x78] sm:$0xff]
    %v101 = vld [vmem:[#allocation5 + $0x80] sm:$0xff]
    %v102 = vld [vmem:[#allocation5 + $0x88] sm:$0xff]
    %v103 = vld [vmem:[#allocation5 + $0x90] sm:$0xff]
    %v104 = vld [vmem:[#allocation5 + $0x98] sm:$0xff]
    %v105 = vld [vmem:[#allocation5 + $0xa0] sm:$0xff]
    %v106 = vld [vmem:[#allocation5 + $0xa8] sm:$0xff]
    %v107 = vld [vmem:[#allocation5 + $0xb0] sm:$0xff]
    %v108 = vld [vmem:[#allocation5 + $0xb8] sm:$0xff]
    %v109 = vld [vmem:[#allocation5 + $0xc0] sm:$0xff]
    %v110 = vld [vmem:[#allocation5 + $0xc8] sm:$0xff]
    %v111 = vld [vmem:[#allocation5 + $0xd0] sm:$0xff]
    %v112 = vld [vmem:[#allocation5 + $0xd8] sm:$0xff]
    %v113 = vld [vmem:[#allocation5 + $0xe0] sm:$0xff]
    %v114 = vld [vmem:[#allocation5 + $0xe8] sm:$0xff]
    %v115 = vld [vmem:[#allocation5 + $0xf0] sm:$0xff]
    %v116 = vld [vmem:[#allocation5 + $0xf8] sm:$0xff]
    %v117 = vld [vmem:[#allocation5 + $0x100] sm:$0xff]
    %v118 = vld [vmem:[#allocation5 + $0x108] sm:$0xff]
    %v119 = vld [vmem:[#allocation5 + $0x110] sm:$0xff]
    %v120 = vld [vmem:[#allocation5 + $0x118] sm:$0xff]
    %v121 = vld [vmem:[#allocation5 + $0x120] sm:$0xff]
    %v122 = vld [vmem:[#allocation5 + $0x128] sm:$0xff]
    %v123 = vld [vmem:[#allocation5 + $0x130] sm:$0xff]
    %v124 = vld [vmem:[#allocation5 + $0x138] sm:$0xff]
    %v125 = vld [vmem:[#allocation5 + $0x140] sm:$0xff]
    %v126 = vld [vmem:[#allocation5 + $0x148] sm:$0xff]
    %v127 = vld [vmem:[#allocation5 + $0x150] sm:$0xff]
    %v128 = vld [vmem:[#allocation5 + $0x158] sm:$0xff]
    %v129 = vld [vmem:[#allocation5 + $0x160] sm:$0xff]
    %v130 = vld [vmem:[#allocation5 + $0x168] sm:$0xff]
    %v131 = vld [vmem:[#allocation5 + $0x170] sm:$0xff]
    %v132 = vld [vmem:[#allocation5 + $0x178] sm:$0xff]
    %v133 = vld [vmem:[#allocation5 + $0x180] sm:$0xff]
    %v134 = vld [vmem:[#allocation5 + $0x188] sm:$0xff]
    %v135 = vld [vmem:[#allocation5 + $0x190] sm:$0xff]
    %v136 = vld [vmem:[#allocation5 + $0x198] sm:$0xff]
    %v137 = vld [vmem:[#allocation5 + $0x1a0] sm:$0xff]
    %v138 = vld [vmem:[#allocation5 + $0x1a8] sm:$0xff]
    %v139 = vld [vmem:[#allocation5 + $0x1b0] sm:$0xff]
    %v140 = vld [vmem:[#allocation5 + $0x1b8] sm:$0xff]
    %v141 = vld [vmem:[#allocation5 + $0x1c0] sm:$0xff]
    %v142 = vld [vmem:[#allocation5 + $0x1c8] sm:$0xff]
    %v143 = vld [vmem:[#allocation5 + $0x1d0] sm:$0xff]
    %v144 = vld [vmem:[#allocation5 + $0x1d8] sm:$0xff]
    %v145 = vld [vmem:[#allocation5 + $0x1e0] sm:$0xff]
    %v146 = vld [vmem:[#allocation5 + $0x1e8] sm:$0xff]
    %v147 = vld [vmem:[#allocation5 + $0x1f0] sm:$0xff]
    %v148 = vld [vmem:[#allocation5 + $0x1f8] sm:$0xff]
    %v149 = vld [vmem:[#allocation5 + $0x200] sm:$0xff]
    %v150 = vld [vmem:[#allocation5 + $0x208] sm:$0xff]
    %v151 = vld [vmem:[#allocation5 + $0x210] sm:$0xff]
    %v152 = vld [vmem:[#allocation5 + $0x218] sm:$0xff]
    %v153 = vld [vmem:[#allocation5 + $0x220] sm:$0xff]
    %v154 = vld [vmem:[#allocation5 + $0x228] sm:$0xff]
    %v155 = vld [vmem:[#allocation5 + $0x230] sm:$0xff]
    %v156 = vld [vmem:[#allocation5 + $0x238] sm:$0xff]
    %v157 = vld [vmem:[#allocation5 + $0x240] sm:$0xff]
    %v158 = vld [vmem:[#allocation5 + $0x248] sm:$0xff]
    %v159 = vld [vmem:[#allocation5 + $0x250] sm:$0xff]
    %v160 = vld [vmem:[#allocation5 + $0x258] sm:$0xff]
    %v161 = vld [vmem:[#allocation5 + $0x260] sm:$0xff]
    %v162 = vld [vmem:[#allocation5 + $0x268] sm:$0xff]
    %v163 = vld [vmem:[#allocation5 + $0x270] sm:$0xff]
    %v164 = vld [vmem:[#allocation5 + $0x278] sm:$0xff]
    %v165 = vld [vmem:[#allocation5 + $0x280] sm:$0xff]
    %v166 = vld [vmem:[#allocation5 + $0x288] sm:$0xff]
    %v167 = vld [vmem:[#allocation5 + $0x290] sm:$0xff]
    %v168 = vld [vmem:[#allocation5 + $0x298] sm:$0xff]
    %v169 = vld [vmem:[#allocation5 + $0x2a0] sm:$0xff]
    %v170 = vld [vmem:[#allocation5 + $0x2a8] sm:$0xff]
    %v171 = vld [vmem:[#allocation5 + $0x2b0] sm:$0xff]
    %v172 = vld [vmem:[#allocation5 + $0x2b8] sm:$0xff]
    %v173 = vld [vmem:[#allocation5 + $0x2c0] sm:$0xff]
    %v174 = vld [vmem:[#allocation5 + $0x2c8] sm:$0xff]
    %v175 = vld [vmem:[#allocation5 + $0x2d0] sm:$0xff]
    %v176 = vld [vmem:[#allocation5 + $0x2d8] sm:$0xff]
    %v177 = vld [vmem:[#allocation5 + $0x2e0] sm:$0xff]
    %v178 = vld [vmem:[#allocation5 + $0x2e8] sm:$0xff]
    %v179 = vld [vmem:[#allocation5 + $0x2f0] sm:$0xff]
    %v180 = vld [vmem:[#allocation5 + $0x2f8] sm:$0xff]
    %v181 = vld [vmem:[#allocation5 + $0x300] sm:$0xff]
    %v182 = vld [vmem:[#allocation5 + $0x308] sm:$0xff]
    %v183 = vld [vmem:[#allocation5 + $0x310] sm:$0xff]
    %v184 = vld [vmem:[#allocation5 + $0x318] sm:$0xff]
    %v185 = vld [vmem:[#allocation5 + $0x320] sm:$0xff]
    %v186 = vld [vmem:[#allocation5 + $0x328] sm:$0xff]
    %v187 = vld [vmem:[#allocation5 + $0x330] sm:$0xff]
    %v188 = vld [vmem:[#allocation5 + $0x338] sm:$0xff]
    %v189 = vld [vmem:[#allocation5 + $0x340] sm:$0xff]
    %v190 = vld [vmem:[#allocation5 + $0x348] sm:$0xff]
    %v191 = vld [vmem:[#allocation5 + $0x350] sm:$0xff]
    %v192 = vld [vmem:[#allocation5 + $0x358] sm:$0xff]
    %v193 = vld [vmem:[#allocation5 + $0x360] sm:$0xff]
    %v194 = vld [vmem:[#allocation5 + $0x368] sm:$0xff]
    %v195 = vld [vmem:[#allocation5 + $0x370] sm:$0xff]
    %v196 = vld [vmem:[#allocation5 + $0x378] sm:$0xff]
    %v197 = vld [vmem:[#allocation5 + $0x380] sm:$0xff]
    %v198 = vld [vmem:[#allocation5 + $0x388] sm:$0xff]
    %v199 = vld [vmem:[#allocation5 + $0x390] sm:$0xff]
    %v200 = vld [vmem:[#allocation5 + $0x398] sm:$0xff]
    %v201 = vld [vmem:[#allocation5 + $0x3a0] sm:$0xff]
    %v202 = vld [vmem:[#allocation5 + $0x3a8] sm:$0xff]
    %v203 = vld [vmem:[#allocation5 + $0x3b0] sm:$0xff]
    %v204 = vld [vmem:[#allocation5 + $0x3b8] sm:$0xff]
    %v205 = vld [vmem:[#allocation5 + $0x3c0] sm:$0xff]
    %v206 = vld [vmem:[#allocation5 + $0x3c8] sm:$0xff]
    %v207 = vld [vmem:[#allocation5 + $0x3d0] sm:$0xff]
    %v208 = vld [vmem:[#allocation5 + $0x3d8] sm:$0xff]
    %v209 = vld [vmem:[#allocation5 + $0x3e0] sm:$0xff]
    %v210 = vld [vmem:[#allocation5 + $0x3e8] sm:$0xff]
    %v211 = vld [vmem:[#allocation5 + $0x3f0] sm:$0xff]
    %v212 = vld [vmem:[#allocation5 + $0x3f8] sm:$0xff]
    %213 = vmatprep.subr.mxu0 %v86
    %214 = vmatpush1.msra.mxu0 %v85
    %215 = vmatprep.subr.mxu0 %v88
    %216 = vmatpush1.msra.mxu0 %v87
    %217 = vmatprep.subr.mxu0 %v90
    %218 = vmatpush1.msra.mxu0 %v89
    %219 = vmatprep.subr.mxu0 %v92
    %220 = vmatpush1.msra.mxu0 %v91
    %221 = vmatprep.subr.mxu0 %v94
    %222 = vmatpush1.msra.mxu0 %v93
    %223 = vmatprep.subr.mxu0 %v96
    %224 = vmatpush1.msra.mxu0 %v95
    %225 = vmatprep.subr.mxu0 %v98
    %226 = vmatpush1.msra.mxu0 %v97
    %227 = vmatprep.subr.mxu0 %v100
    %228 = vmatpush1.msra.mxu0 %v99
    %229 = vmatprep.subr.mxu0 %v102
    %230 = vmatpush1.msra.mxu0 %v101
    %231 = vmatprep.subr.mxu0 %v104
    %232 = vmatpush1.msra.mxu0 %v103
    %233 = vmatprep.subr.mxu0 %v106
    %234 = vmatpush1.msra.mxu0 %v105
    %235 = vmatprep.subr.mxu0 %v108
    %236 = vmatpush1.msra.mxu0 %v107
    %237 = vmatprep.subr.mxu0 %v110
    %238 = vmatpush1.msra.mxu0 %v109
    %239 = vmatprep.subr.mxu0 %v112
    %240 = vmatpush1.msra.mxu0 %v111
    %241 = vmatprep.subr.mxu0 %v114
    %242 = vmatpush1.msra.mxu0 %v113
    %243 = vmatprep.subr.mxu0 %v116
    %244 = vmatpush1.msra.mxu0 %v115
    %245 = vmatprep.subr.mxu0 %v118
    %246 = vmatpush1.msra.mxu0 %v117
    %247 = vmatprep.subr.mxu0 %v120
    %248 = vmatpush1.msra.mxu0 %v119
    %249 = vmatprep.subr.mxu0 %v122
    %250 = vmatpush1.msra.mxu0 %v121
    %251 = vmatprep.subr.mxu0 %v124
    %252 = vmatpush1.msra.mxu0 %v123
    %253 = vmatprep.subr.mxu0 %v126
    %254 = vmatpush1.msra.mxu0 %v125
    %255 = vmatprep.subr.mxu0 %v128
    %256 = vmatpush1.msra.mxu0 %v127
    %257 = vmatprep.subr.mxu0 %v130
    %258 = vmatpush1.msra.mxu0 %v129
    %259 = vmatprep.subr.mxu0 %v132
    %260 = vmatpush1.msra.mxu0 %v131
    %261 = vmatprep.subr.mxu0 %v134
    %262 = vmatpush1.msra.mxu0 %v133
    %263 = vmatprep.subr.mxu0 %v136
    %264 = vmatpush1.msra.mxu0 %v135
    %265 = vmatprep.subr.mxu0 %v138
    %266 = vmatpush1.msra.mxu0 %v137
    %267 = vmatprep.subr.mxu0 %v140
    %268 = vmatpush1.msra.mxu0 %v139
    %269 = vmatprep.subr.mxu0 %v142
    %270 = vmatpush1.msra.mxu0 %v141
    %271 = vmatprep.subr.mxu0 %v144
    %272 = vmatpush1.msra.mxu0 %v143
    %273 = vmatprep.subr.mxu0 %v146
    %274 = vmatpush1.msra.mxu0 %v145
    %275 = vmatprep.subr.mxu0 %v148
    %276 = vmatpush1.msra.mxu0 %v147
    %277 = vmatprep.mubr.f32.mxu0 %v82
    %278 = vmatmul.mubr.f32.gmra.mrb[0].mxu0 %v81
    %v279 = vpop.f32.mrb[0].mxu0
    %v280 = vadd.f32 0.0, %v279
    %v281 = vpop.f32.mrb[0].mxu0
    %v282 = vadd.f32 0.0, %v281
    %283 = vdwg.mxu0
    %284 = vmatprep.subr.mxu0 %v150
    %285 = vmatpush1.msra.mxu0 %v149
    %286 = vmatprep.subr.mxu0 %v152
    %287 = vmatpush1.msra.mxu0 %v151
    %288 = vmatprep.subr.mxu0 %v154
    %289 = vmatpush1.msra.mxu0 %v153
    %290 = vmatprep.subr.mxu0 %v156
    %291 = vmatpush1.msra.mxu0 %v155
    %292 = vmatprep.subr.mxu0 %v158
    %293 = vmatpush1.msra.mxu0 %v157
    %294 = vmatprep.subr.mxu0 %v160
    %295 = vmatpush1.msra.mxu0 %v159
    %296 = vmatprep.subr.mxu0 %v162
    %297 = vmatpush1.msra.mxu0 %v161
    %298 = vmatprep.subr.mxu0 %v164
    %299 = vmatpush1.msra.mxu0 %v163
    %300 = vmatprep.subr.mxu0 %v166
    %301 = vmatpush1.msra.mxu0 %v165
    %302 = vmatprep.subr.mxu0 %v168
    %303 = vmatpush1.msra.mxu0 %v167
    %304 = vmatprep.subr.mxu0 %v170
    %305 = vmatpush1.msra.mxu0 %v169
    %306 = vmatprep.subr.mxu0 %v172
    %307 = vmatpush1.msra.mxu0 %v171
    %308 = vmatprep.subr.mxu0 %v174
    %309 = vmatpush1.msra.mxu0 %v173
    %310 = vmatprep.subr.mxu0 %v176
    %311 = vmatpush1.msra.mxu0 %v175
    %312 = vmatprep.subr.mxu0 %v178
    %313 = vmatpush1.msra.mxu0 %v177
    %314 = vmatprep.subr.mxu0 %v180
    %315 = vmatpush1.msra.mxu0 %v179
    %316 = vmatprep.subr.mxu0 %v182
    %317 = vmatpush1.msra.mxu0 %v181
    %318 = vmatprep.subr.mxu0 %v184
    %319 = vmatpush1.msra.mxu0 %v183
    %320 = vmatprep.subr.mxu0 %v186
    %321 = vmatpush1.msra.mxu0 %v185
    %322 = vmatprep.subr.mxu0 %v188
    %323 = vmatpush1.msra.mxu0 %v187
    %324 = vmatprep.subr.mxu0 %v190
    %325 = vmatpush1.msra.mxu0 %v189
    %326 = vmatprep.subr.mxu0 %v192
    %327 = vmatpush1.msra.mxu0 %v191
    %328 = vmatprep.subr.mxu0 %v194
    %329 = vmatpush1.msra.mxu0 %v193
    %330 = vmatprep.subr.mxu0 %v196
    %331 = vmatpush1.msra.mxu0 %v195
    %332 = vmatprep.subr.mxu0 %v198
    %333 = vmatpush1.msra.mxu0 %v197
    %334 = vmatprep.subr.mxu0 %v200
    %335 = vmatpush1.msra.mxu0 %v199
    %336 = vmatprep.subr.mxu0 %v202
    %337 = vmatpush1.msra.mxu0 %v201
    %338 = vmatprep.subr.mxu0 %v204
    %339 = vmatpush1.msra.mxu0 %v203
    %340 = vmatprep.subr.mxu0 %v206
    %341 = vmatpush1.msra.mxu0 %v205
    %342 = vmatprep.subr.mxu0 %v208
    %343 = vmatpush1.msra.mxu0 %v207
    %344 = vmatprep.subr.mxu0 %v210
    %345 = vmatpush1.msra.mxu0 %v209
    %346 = vmatprep.subr.mxu0 %v212
    %347 = vmatpush1.msra.mxu0 %v211
    %348 = vmatprep.mubr.f32.mxu0 %v84
    %349 = vmatmul.mubr.f32.gmra.mrb[0].mxu0 %v83
    %v350 = vpop.f32.mrb[0].mxu0
    %v351 = vadd.f32 %v280, %v350
    %v352 = vpop.f32.mrb[0].mxu0
    %v353 = vadd.f32 %v282, %v352
    %354 = vdwg.mxu0
    %v356 = vlaneseq
    %v357 = vshrl.u32 %v356, 7
    %v358 = vsub.s32 0, %v357
    %v359 = vrot.slane %v80, %v358
    %v360 = vlaneseq
    %v361 = vshrl.u32 %v360, 7
    %v362 = vsub.s32 2, %v361
    %v363 = vrot.slane %v80, %v362
    %v366 = vlaneseq
    %v367 = vshrl.u32 %v366, 7
    %v368 = vsub.s32 0, %v367
    %v369 = vrot.slane %v359, %v368
    %v370 = vlaneseq
    %v371 = vshrl.u32 %v370, 7
    %v372 = vsub.s32 0, %v371
    %v373 = vrot.slane %v363, %v372
    %v374 = vmul.f32 %v351, %v369
    %v375 = vmul.f32 %v353, %v373
    %v376 = vlaneseq
    %v377 = vshrl.u32 %v376, 7
    %v378 = vsub.s32 1, %v377
    %v379 = vrot.slane %v80, %v378
    %v380 = vlaneseq
    %v381 = vshrl.u32 %v380, 7
    %v382 = vsub.s32 3, %v381
    %v383 = vrot.slane %v80, %v382
    %v386 = vlaneseq
    %v387 = vshrl.u32 %v386, 7
    %v388 = vsub.s32 1, %v387
    %v389 = vrot.slane %v379, %v388
    %v390 = vlaneseq
    %v391 = vshrl.u32 %v390, 7
    %v392 = vsub.s32 1, %v391
    %v393 = vrot.slane %v383, %v392
    %v394 = vadd.f32 %v374, %v389
    %v395 = vadd.f32 %v375, %v393
    %v396 = vmax.f32 %v394, 0.0
    %v397 = vmax.f32 %v395, 0.0
    %v398 = vld [vmem:[%s4] sm:$0x3]
    %v399 = vld [vmem:[#allocation7] sm:$0xff]
    %v400 = vld [vmem:[#allocation7 + $0x8] sm:$0xff]
    %v401 = vld [vmem:[#allocation7 + $0x10] sm:$0xff]
    %v402 = vld [vmem:[#allocation7 + $0x18] sm:$0xff]
    %v403 = vld [vmem:[#allocation7 + $0x20] sm:$0xff]
    %v404 = vld [vmem:[#allocation7 + $0x28] sm:$0xff]
    %v405 = vld [vmem:[#allocation7 + $0x30] sm:$0xff]
    %v406 = vld [vmem:[#allocation7 + $0x38] sm:$0xff]
    %v407 = vld [vmem:[#allocation7 + $0x40] sm:$0xff]
    %v408 = vld [vmem:[#allocation7 + $0x48] sm:$0xff]
    %v409 = vld [vmem:[#allocation7 + $0x50] sm:$0xff]
    %v410 = vld [vmem:[#allocation7 + $0x58] sm:$0xff]
    %v411 = vld [vmem:[#allocation7 + $0x60] sm:$0xff]
    %v412 = vld [vmem:[#allocation7 + $0x68] sm:$0xff]
    %v413 = vld [vmem:[#allocation7 + $0x70] sm:$0xff]
    %v414 = vld [vmem:[#allocation7 + $0x78] sm:$0xff]
    %v415 = vld [vmem:[#allocation7 + $0x80] sm:$0xff]
    %v416 = vld [vmem:[#allocation7 + $0x88] sm:$0xff]
    %v417 = vld [vmem:[#allocation7 + $0x90] sm:$0xff]
    %v418 = vld [vmem:[#allocation7 + $0x98] sm:$0xff]
    %v419 = vld [vmem:[#allocation7 + $0xa0] sm:$0xff]
    %v420 = vld [vmem:[#allocation7 + $0xa8] sm:$0xff]
    %v421 = vld [vmem:[#allocation7 + $0xb0] sm:$0xff]
    %v422 = vld [vmem:[#allocation7 + $0xb8] sm:$0xff]
    %v423 = vld [vmem:[#allocation7 + $0xc0] sm:$0xff]
    %v424 = vld [vmem:[#allocation7 + $0xc8] sm:$0xff]
    %v425 = vld [vmem:[#allocation7 + $0xd0] sm:$0xff]
    %v426 = vld [vmem:[#allocation7 + $0xd8] sm:$0xff]
    %v427 = vld [vmem:[#allocation7 + $0xe0] sm:$0xff]
    %v428 = vld [vmem:[#allocation7 + $0xe8] sm:$0xff]
    %v429 = vld [vmem:[#allocation7 + $0xf0] sm:$0xff]
    %v430 = vld [vmem:[#allocation7 + $0xf8] sm:$0xff]
    %431 = vmatprep.subr.mxu0 0.0
    %432 = vmatpush1.msra.mxu0 %v399
    %433 = vmatprep.subr.mxu0 0.0
    %434 = vmatpush1.msra.mxu0 %v400
    %435 = vmatprep.subr.mxu0 0.0
    %436 = vmatpush1.msra.mxu0 %v401
    %437 = vmatprep.subr.mxu0 0.0
    %438 = vmatpush1.msra.mxu0 %v402
    %439 = vmatprep.subr.mxu0 0.0
    %440 = vmatpush1.msra.mxu0 %v403
    %441 = vmatprep.subr.mxu0 0.0
    %442 = vmatpush1.msra.mxu0 %v404
    %443 = vmatprep.subr.mxu0 0.0
    %444 = vmatpush1.msra.mxu0 %v405
    %445 = vmatprep.subr.mxu0 0.0
    %446 = vmatpush1.msra.mxu0 %v406
    %447 = vmatprep.subr.mxu0 0.0
    %448 = vmatpush1.msra.mxu0 %v407
    %449 = vmatprep.subr.mxu0 0.0
    %450 = vmatpush1.msra.mxu0 %v408
    %451 = vmatprep.subr.mxu0 0.0
    %452 = vmatpush1.msra.mxu0 %v409
    %453 = vmatprep.subr.mxu0 0.0
    %454 = vmatpush1.msra.mxu0 %v410
    %455 = vmatprep.subr.mxu0 0.0
    %456 = vmatpush1.msra.mxu0 %v411
    %457 = vmatprep.subr.mxu0 0.0
    %458 = vmatpush1.msra.mxu0 %v412
    %459 = vmatprep.subr.mxu0 0.0
    %460 = vmatpush1.msra.mxu0 %v413
    %461 = vmatprep.subr.mxu0 0.0
    %462 = vmatpush1.msra.mxu0 %v414
    %463 = vmatprep.subr.mxu0 0.0
    %464 = vmatpush1.msra.mxu0 %v415
    %465 = vmatprep.subr.mxu0 0.0
    %466 = vmatpush1.msra.mxu0 %v416
    %467 = vmatprep.subr.mxu0 0.0
    %468 = vmatpush1.msra.mxu0 %v417
    %469 = vmatprep.subr.mxu0 0.0
    %470 = vmatpush1.msra.mxu0 %v418
    %471 = vmatprep.subr.mxu0 0.0
    %472 = vmatpush1.msra.mxu0 %v419
    %473 = vmatprep.subr.mxu0 0.0
    %474 = vmatpush1.msra.mxu0 %v420
    %475 = vmatprep.subr.mxu0 0.0
    %476 = vmatpush1.msra.mxu0 %v421
    %477 = vmatprep.subr.mxu0 0.0
    %478 = vmatpush1.msra.mxu0 %v422
    %479 = vmatprep.subr.mxu0 0.0
    %480 = vmatpush1.msra.mxu0 %v423
    %481 = vmatprep.subr.mxu0 0.0
    %482 = vmatpush1.msra.mxu0 %v424
    %483 = vmatprep.subr.mxu0 0.0
    %484 = vmatpush1.msra.mxu0 %v425
    %485 = vmatprep.subr.mxu0 0.0
    %486 = vmatpush1.msra.mxu0 %v426
    %487 = vmatprep.subr.mxu0 0.0
    %488 = vmatpush1.msra.mxu0 %v427
    %489 = vmatprep.subr.mxu0 0.0
    %490 = vmatpush1.msra.mxu0 %v428
    %491 = vmatprep.subr.mxu0 0.0
    %492 = vmatpush1.msra.mxu0 %v429
    %493 = vmatprep.subr.mxu0 0.0
    %494 = vmatpush1.msra.mxu0 %v430
    %495 = vmatprep.mubr.f32.mxu0 %v397
    %496 = vmatmul.mubr.f32.gmra.mrb[0].mxu0 %v396
    %v497 = vpop.f32.mrb[0].mxu0
    %v498 = vadd.f32 0.0, %v497
    %v499 = vpop.f32.mrb[0].mxu0
    %500 = vdwg.mxu0
    %v501 = vlaneseq
    %v502 = vshrl.u32 %v501, 7
    %v503 = vsub.s32 0, %v502
    %v504 = vrot.slane %v398, %v503
    %v505 = vmul.f32 %v498, %v504
    %v506 = vlaneseq
    %v507 = vshrl.u32 %v506, 7
    %v508 = vsub.s32 1, %v507
    %v509 = vrot.slane %v398, %v508
    %v510 = vadd.f32 %v505, %v509
    %v511 = vmax.f32 %v510, 0.0
    %v512 = vld [vmem:[#allocation8] sm:$0xff]
    %v513 = vld [vmem:[#allocation8 + $0x8] sm:$0xff]
    %v514 = vld [vmem:[#allocation8 + $0x10] sm:$0xff]
    %v515 = vld [vmem:[#allocation8 + $0x18] sm:$0xff]
    %v516 = vld [vmem:[#allocation8 + $0x20] sm:$0xff]
    %v517 = vld [vmem:[#allocation8 + $0x28] sm:$0xff]
    %v518 = vld [vmem:[#allocation8 + $0x30] sm:$0xff]
    %v519 = vld [vmem:[#allocation8 + $0x38] sm:$0xff]
    %v520 = vld [vmem:[#allocation8 + $0x40] sm:$0xff]
    %v521 = vld [vmem:[#allocation8 + $0x48] sm:$0xff]
    %v522 = vld [vmem:[#allocation8 + $0x50] sm:$0xff]
    %v523 = vld [vmem:[#allocation8 + $0x58] sm:$0xff]
    %v524 = vld [vmem:[#allocation8 + $0x60] sm:$0xff]
    %v525 = vld [vmem:[#allocation8 + $0x68] sm:$0xff]
    %v526 = vld [vmem:[#allocation8 + $0x70] sm:$0xff]
    %v527 = vld [vmem:[#allocation8 + $0x78] sm:$0xff]
    %v528 = vld [vmem:[%s6] sm:$0x1]
    %v530 = vlaneseq
    %v531 = vshrl.u32 %v530, 7
    %v532 = vsub.s32 0, %v531
    %v533 = vrot.slane %v528, %v532
    %535 = vmatprep.subr.mxu0 0.0
    %536 = vmatpush1.msra.mxu0 %v512
    %537 = vmatprep.subr.mxu0 0.0
    %538 = vmatpush1.msra.mxu0 %v513
    %539 = vmatprep.subr.mxu0 0.0
    %540 = vmatpush1.msra.mxu0 %v514
    %541 = vmatprep.subr.mxu0 0.0
    %542 = vmatpush1.msra.mxu0 %v515
    %543 = vmatprep.subr.mxu0 0.0
    %544 = vmatpush1.msra.mxu0 %v516
    %545 = vmatprep.subr.mxu0 0.0
    %546 = vmatpush1.msra.mxu0 %v517
    %547 = vmatprep.subr.mxu0 0.0
    %548 = vmatpush1.msra.mxu0 %v518
    %549 = vmatprep.subr.mxu0 0.0
    %550 = vmatpush1.msra.mxu0 %v519
    %551 = vmatprep.subr.mxu0 0.0
    %552 = vmatpush1.msra.mxu0 %v520
    %553 = vmatprep.subr.mxu0 0.0
    %554 = vmatpush1.msra.mxu0 %v521
    %555 = vmatprep.subr.mxu0 0.0
    %556 = vmatpush1.msra.mxu0 %v522
    %557 = vmatprep.subr.mxu0 0.0
    %558 = vmatpush1.msra.mxu0 %v523
    %559 = vmatprep.subr.mxu0 0.0
    %560 = vmatpush1.msra.mxu0 %v524
    %561 = vmatprep.subr.mxu0 0.0
    %562 = vmatpush1.msra.mxu0 %v525
    %563 = vmatprep.subr.mxu0 0.0
    %564 = vmatpush1.msra.mxu0 %v526
    %565 = vmatprep.subr.mxu0 0.0
    %566 = vmatpush1.msra.mxu0 %v527
    %567 = vmatprep.subr.mxu0 0.0
    %568 = vmatpush1.msra.mxu0 0.0
    %569 = vmatprep.subr.mxu0 0.0
    %570 = vmatpush1.msra.mxu0 0.0
    %571 = vmatprep.subr.mxu0 0.0
    %572 = vmatpush1.msra.mxu0 0.0
    %573 = vmatprep.subr.mxu0 0.0
    %574 = vmatpush1.msra.mxu0 0.0
    %575 = vmatprep.subr.mxu0 0.0
    %576 = vmatpush1.msra.mxu0 0.0
    %577 = vmatprep.subr.mxu0 0.0
    %578 = vmatpush1.msra.mxu0 0.0
    %579 = vmatprep.subr.mxu0 0.0
    %580 = vmatpush1.msra.mxu0 0.0
    %581 = vmatprep.subr.mxu0 0.0
    %582 = vmatpush1.msra.mxu0 0.0
    %583 = vmatprep.subr.mxu0 0.0
    %584 = vmatpush1.msra.mxu0 0.0
    %585 = vmatprep.subr.mxu0 0.0
    %586 = vmatpush1.msra.mxu0 0.0
    %587 = vmatprep.subr.mxu0 0.0
    %588 = vmatpush1.msra.mxu0 0.0
    %589 = vmatprep.subr.mxu0 0.0
    %590 = vmatpush1.msra.mxu0 0.0
    %591 = vmatprep.subr.mxu0 0.0
    %592 = vmatpush1.msra.mxu0 0.0
    %593 = vmatprep.subr.mxu0 0.0
    %594 = vmatpush1.msra.mxu0 0.0
    %595 = vmatprep.subr.mxu0 0.0
    %596 = vmatpush1.msra.mxu0 0.0
    %597 = vmatprep.subr.mxu0 0.0
    %598 = vmatpush1.msra.mxu0 0.0
    %599 = vmatprep.mubr.f32.mxu0 0.0
    %600 = vmatmul.mubr.f32.gmra.mrb[0].mxu0 %v511
    %v601 = vpop.f32.mrb[0].mxu0
    %v602 = vadd.f32 %v533, %v601
    %v603 = vpop.f32.mrb[0].mxu0
    %604 = vdwg.mxu0
    %605 = vst [vmem:[#allocation10] sm:$0xff] %v602
    // Predicated region
    $region46: #{tpu_custom_call.1} parent=1 // pred_check
      _
    $region47: #{tpu_custom_call.1} parent=1 // pred_check_branch
      %607 = sbr.rel (0) target = $region49
    $region48: #{tpu_custom_call.1} parent=1 // pred_region
      %s609 = ssub.s32 128, 128
      %610 = vsyncadd [#allocation4], %s609
      %s612 = sshll.u32 [#allocation10], 4
      %s613 = int_to_ptr.vmem [resolvable:$true] %s612
      %615 = dma.vmem_to_hbm [thread:$0]  %s613, 128, %s7, [#allocation4]
    $region49: #{tpu_custom_call.1} parent=1 // pred_fallthru
      _
    // Predicated region
    $region50: #{tpu_custom_call.1} parent=1 // pred_check
      _
    $region51: #{tpu_custom_call.1} parent=1 // pred_check_branch
      %617 = sbr.rel (0) target = $region53
    $region52: #{tpu_custom_call.1} parent=1 // pred_region
      %618 = dma.done [#allocation4], 128
    $region53: #{tpu_custom_call.1} parent=1 // pred_fallthru
      _
    %619 = vsyncpa [#allocation3], 1
    %620 = vsyncpa [#allocation6], 1
    %621 = vsyncpa [#allocation9], 1
    %622 = vsyncpa [#allocation4], 1

</llo_original>
